<compile_context>
chip_gen: v7x
topology: tpu7x:2x2x1
jax: 0.10.0
libtpu: 0.0.40
codegen_flags: <defaults>
</compile_context>

<pallas_src>
import math

import jax
import jax.numpy as jnp
from jax.experimental import pallas as pl
from jax.experimental.pallas import tpu as pltpu


# ---------------------------------------------------------------------------
# PE table construction (== PositionalEncoding.extend_pe), cached across calls.
# ---------------------------------------------------------------------------
def _build_pe_table(T, d_model, dtype=jnp.float32):
    """pe[pos, 2i] = sin(pos * exp(-2i*log(1e4)/d)), pe[pos, 2i+1] = cos(...)."""
    position = jnp.arange(T, dtype=jnp.float32)[:, None]                        # (T, 1)
    div_term = jnp.exp(
        jnp.arange(0, d_model, 2, dtype=jnp.float32) * (-math.log(10000.0) / d_model)
    )                                                                           # (ceil(d/2),)
    angles = position * div_term[None, :]                                       # (T, ceil(d/2))
    # Interleave even=sin / odd=cos, then slice to d_model.  Matches PyTorch exactly for
    # even d_model (the PyTorch module itself errors on odd d_model).
    pe = jnp.stack([jnp.sin(angles), jnp.cos(angles)], axis=-1).reshape(T, -1)[:, :d_model]
    return pe.astype(dtype)


_PE_CACHE = {}


def _get_pe_table(T, d_model, dtype):
    key = (int(T), int(d_model), jnp.dtype(dtype).name)
    if key not in _PE_CACHE:
        _PE_CACHE[key] = _build_pe_table(T, d_model, dtype)
    return _PE_CACHE[key]


# ---------------------------------------------------------------------------
# Kernel: fused broadcast-add of the positional encoding.
# ---------------------------------------------------------------------------
def _pe_add_kernel(x_ref, pe_ref, o_ref):
    # x_ref / o_ref : (b_block, t_block, C) tile of the (N, T, C) activation
    # pe_ref        : (t_block, C) tile of the PE table, shared across the batch axis
    o_ref[...] = x_ref[...] + pe_ref[...][None, :, :]


def _choose_blocks(N, T, C, itemsize, target_bytes=2 << 20):
    """Pick (b_block, t_block).

    Strategy: keep the full C as the (lane-dense) last dim, target ~2 MiB activation tiles
    (sweet spot for HBM-roofline streaming adds, safe under v5e's 16 MiB scoped-VMEM default
    with double-buffered x/out/pe), fold batch rows when the whole (T, C) plane is small,
    and align t_block to the dtype's sublane packing (8 / 16 / 32 rows).
    """
    align = max(8, 32 // max(itemsize, 1))          # f32 -> 8, bf16 -> 16, int8/fp8 -> 32
    row_bytes = C * itemsize
    max_rows = max(1, target_bytes // row_bytes)

    if T <= max_rows:
        # Whole time extent fits in one tile: fold batch to amortize per-grid-step overhead.
        t_block = T
        plane_bytes = max(1, T * row_bytes)
        b_block = max(1, min(N, target_bytes // plane_bytes))
        while N % b_block:                           # keep an exact divisor of N
            b_block -= 1
        return b_block, t_block

    # Tile the time axis: largest multiple of `align` that fits the target.
    t_block = (max_rows // align) * align
    if t_block == 0:
        t_block = min(T, align)
    t_block = min(t_block, T)
    return 1, t_block


def positional_encoding_forward(x, *, block_override=None):
    """x: (N, T, C) -> (N, T, C); eval-mode forward of PositionalEncoding."""
    N, T, C = x.shape
    itemsize = jnp.dtype(x.dtype).itemsize
    pe = _get_pe_table(T, C, x.dtype)                                           # (T, C)

    if block_override is not None:
        b_block, t_block = block_override
    else:
        b_block, t_block = _choose_blocks(N, T, C, itemsize)

    num_t_tiles = pl.cdiv(T, t_block)
    num_n_tiles = pl.cdiv(N, b_block)
    grid = (num_t_tiles, num_n_tiles)                # time tiles OUTER, batch INNER

    in_specs = [
        # Activation tile: batch-innermost iteration order, lane-dense full-C last dim.
        pl.BlockSpec((b_block, t_block, C), lambda t, n: (n, t, 0)),
        # PE tile: block index depends only on t -> stays VMEM-resident across the batch loop.
        pl.BlockSpec((t_block, C), lambda t, n: (t, 0)),
    ]
    out_specs = pl.BlockSpec((b_block, t_block, C), lambda t, n: (n, t, 0))

    # Megacore (v7x): put "parallel" on whichever grid axis has extent >= 2.
    if num_t_tiles >= 2:
        dim_sem = ("parallel", "arbitrary")
    else:
        dim_sem = ("arbitrary", "parallel")

    # VMEM budget: double-buffered x, out, pe tiles.  Only raise the scoped limit when the
    # default (16 MiB on v5e) would actually be exceeded; never ask above ~30 MiB (v7x-safe).
    tile_bytes = b_block * t_block * C * itemsize
    pe_tile_bytes = t_block * C * itemsize
    vmem_need = 2 * (2 * tile_bytes + pe_tile_bytes)
    compiler_kwargs = dict(dimension_semantics=dim_sem)
    if vmem_need > (12 << 20):
        compiler_kwargs["vmem_limit_bytes"] = int(min(vmem_need + (4 << 20), 30 << 20))

    # NOTE: callers that do not reuse x afterwards could add input_output_aliases={0: 0}
    # to avoid allocating a second (N, T, C) HBM buffer (capacity, not bandwidth, win).
    return pl.pallas_call(
        _pe_add_kernel,
        out_shape=jax.ShapeDtypeStruct((N, T, C), x.dtype),
        grid=grid,
        in_specs=in_specs,
        out_specs=out_specs,
        compiler_params=pltpu.CompilerParams(**compiler_kwargs),
    )(x, pe)


if __name__ == "__main__":
    # Small shapes consistent with the module: (N, T, C) = (batch, time, d_model).
    N, T, C = 2, 16, 128
    key = jax.random.PRNGKey(0)
    x = jax.random.normal(key, (N, T, C), jnp.float32)

    out = positional_encoding_forward(x)
    out = jax.block_until_ready(out)

    # Correctness vs. pure-JAX reference (eval mode: dropout is identity, xscale unused).
    ref = x + _build_pe_table(T, C, dtype=x.dtype)[None, :, :]
    assert out.shape == (N, T, C) and out.dtype == x.dtype
    assert bool(jnp.all(jnp.isfinite(out)))
    assert bool(jnp.allclose(out, ref, atol=1e-6, rtol=1e-6))
    print("KERNEL_OK")
</pallas_src>

<mosaic_0001>
module attributes {stable_mosaic.version = 11 : i64} {
  func.func @_pe_add_kernel(%arg0: i32, %arg1: i32, %arg2: memref<2x16x128xf32, #tpu.memory_space<vmem>>, %arg3: memref<16x128xf32, #tpu.memory_space<vmem>>, %arg4: memref<2x16x128xf32, #tpu.memory_space<vmem>>) attributes {dimension_semantics = [#tpu.dimension_semantics<arbitrary>, #tpu.dimension_semantics<parallel>], iteration_bounds = array<i64: 1, 1>, scalar_prefetch = 0 : i64, scratch_operands = 0 : i64, tpu.core_type = #tpu.core_type<tc>, window_params = [{transform_indices = @transform_0, window_bounds = array<i64: 2, 16, 128>}, {transform_indices = @transform_1, window_bounds = array<i64: 16, 128>}, {transform_indices = @transform_2, window_bounds = array<i64: 2, 16, 128>}]} {
    %c0 = arith.constant 0 : index
    %c0_0 = arith.constant 0 : index
    %c0_1 = arith.constant 0 : index
    %0 = vector.load %arg2[%c0, %c0_0, %c0_1] : memref<2x16x128xf32, #tpu.memory_space<vmem>>, vector<2x16x128xf32>
    %c0_2 = arith.constant 0 : index
    %c0_3 = arith.constant 0 : index
    %1 = vector.load %arg3[%c0_2, %c0_3] : memref<16x128xf32, #tpu.memory_space<vmem>>, vector<16x128xf32>
    %2 = vector.shape_cast %1 : vector<16x128xf32> to vector<1x16x128xf32>
    %3 = vector.broadcast %2 : vector<1x16x128xf32> to vector<2x16x128xf32>
    %4 = arith.addf %0, %3 : vector<2x16x128xf32>
    %c0_4 = arith.constant 0 : index
    %c0_5 = arith.constant 0 : index
    %c0_6 = arith.constant 0 : index
    %5 = vector.load %arg4[%c0_4, %c0_5, %c0_6] : memref<2x16x128xf32, #tpu.memory_space<vmem>>, vector<2x16x128xf32>
    tpu.vector_store %arg4[%c0_4, %c0_5, %c0_6], %4 {strides = array<i32>} : memref<2x16x128xf32, #tpu.memory_space<vmem>>, vector<2x16x128xf32>,
    return
  }
  func.func @transform_0(%arg0: i32, %arg1: i32) -> (i32, i32, i32) {
    %c0_i32 = arith.constant 0 : i32
    %c0_i32_0 = arith.constant 0 : i32
    return %arg1, %arg0, %c0_i32 : i32, i32, i32
  }
  func.func @transform_1(%arg0: i32, %arg1: i32) -> (i32, i32) {
    %c0_i32 = arith.constant 0 : i32
    %c0_i32_0 = arith.constant 0 : i32
    return %arg0, %c0_i32 : i32, i32
  }
  func.func @transform_2(%arg0: i32, %arg1: i32) -> (i32, i32, i32) {
    %c0_i32 = arith.constant 0 : i32
    %c0_i32_0 = arith.constant 0 : i32
    return %arg1, %arg0, %c0_i32 : i32, i32, i32
  }
}

</mosaic_0001>

<llo_original>
// kernel: tpu_custom_call.1
$region0: #{tpu_custom_call.1}
  #allocation0 [shape = 'u32[]', space=smem, size = 0x4, offset = 0x4, fixed_abs, tag = 'smem constant byte address 0x4 - core index']
  #allocation1 [shape = 'u32[144,128]{1,0:T(1,128)}', space=vmem, size = 0x12000, scoped, tag = 'internal scratch']
  %s0 = inlined_call_operand.hbm [shape: f32[2,16,128], index: 0, kind: input, shape index: {}]
  %s1 = inlined_call_operand.hbm [shape: f32[16,128], index: 1, kind: input, shape index: {}]
  %s2 = inlined_call_operand.hbm [shape: f32[2,16,128], index: 2, kind: output, shape index: {}]
  %s3 = sld [smem:[#allocation0]]
  $region26: #{tpu_custom_call.1} parent=0
    _
  %s5 = ssub.s32 1, %s3
  %s6 = scalar_select 0, %s5, %s3
  $region1: #{tpu_custom_call.1} parent=0
    #allocation2 [shape = 'u8[16384]{0}', space=vmem, size = 0x4000, scoped, tag = 'input window, operand 0, single buffered']
    #allocation3 [shape = 's32[1]{0}', space=sflag, size = 0x4, scoped, tag = 'scoped memory for tpu_custom_call.1']
    #allocation4 [shape = 's32[1]{0}', space=sflag, size = 0x4, scoped, tag = 'scoped memory for tpu_custom_call.1']
    #allocation5 [shape = 'u8[8192]{0}', space=vmem, size = 0x2000, scoped, tag = 'input window, operand 1, single buffered']
    #allocation6 [shape = 's32[1]{0}', space=sflag, size = 0x4, scoped, tag = 'scoped memory for tpu_custom_call.1']
    #allocation7 [shape = 'u8[16384]{0}', space=vmem, size = 0x4000, scoped, tag = 'output window, operand 0, single buffered']
    %7 = vsyncpa [#allocation3], 0
    %8 = vsyncpa [#allocation6], 0
    %9 = vsyncpa [#allocation4], 0
    // Predicated region
    $region2: #{tpu_custom_call.1} parent=1 // pred_check
      _
    $region3: #{tpu_custom_call.1} parent=1 // pred_check_branch
      %11 = sbr.rel (0) target = $region5
    $region4: #{tpu_custom_call.1} parent=1 // pred_region
      %s13 = ssub.s32 512, 512
      %14 = vsyncadd [#allocation3], %s13
      %s15 = sshll.u32 [#allocation2], 4
      %s16 = int_to_ptr.vmem [resolvable:$true] %s15
      %21 = dma.hbm_to_vmem [thread:$0]  %s0, 512, %s16, [#allocation3], 128, 128, 8
    $region5: #{tpu_custom_call.1} parent=1 // pred_fallthru
      _
    // Predicated region
    $region6: #{tpu_custom_call.1} parent=1 // pred_check
      _
    $region7: #{tpu_custom_call.1} parent=1 // pred_check_branch
      %23 = sbr.rel (0) target = $region9
    $region8: #{tpu_custom_call.1} parent=1 // pred_region
      %s25 = ssub.s32 256, 256
      %26 = vsyncadd [#allocation6], %s25
      %s27 = sshll.u32 [#allocation5], 4
      %s28 = int_to_ptr.vmem [resolvable:$true] %s27
      %33 = dma.hbm_to_vmem [thread:$0]  %s1, 256, %s28, [#allocation6], 128, 128, 8
    $region9: #{tpu_custom_call.1} parent=1 // pred_fallthru
      _
    // Predicated region
    $region10: #{tpu_custom_call.1} parent=1 // pred_check
      _
    $region11: #{tpu_custom_call.1} parent=1 // pred_check_branch
      %35 = sbr.rel (0) target = $region13
    $region12: #{tpu_custom_call.1} parent=1 // pred_region
      %36 = dma.done [#allocation3], 512
    $region13: #{tpu_custom_call.1} parent=1 // pred_fallthru
      _
    // Predicated region
    $region14: #{tpu_custom_call.1} parent=1 // pred_check
      _
    $region15: #{tpu_custom_call.1} parent=1 // pred_check_branch
      %38 = sbr.rel (0) target = $region17
    $region16: #{tpu_custom_call.1} parent=1 // pred_region
      %39 = dma.done [#allocation6], 256
    $region17: #{tpu_custom_call.1} parent=1 // pred_fallthru
      _
    %v40 = vld [vmem:[#allocation2] sm:$0xff]
    %v41 = vld [vmem:[#allocation2 + $0x8] sm:$0xff]
    %v42 = vld [vmem:[#allocation2 + $0x10] sm:$0xff]
    %v43 = vld [vmem:[#allocation2 + $0x18] sm:$0xff]
    %v44 = vld [vmem:[#allocation5] sm:$0xff]
    %v45 = vld [vmem:[#allocation5 + $0x8] sm:$0xff]
    %v46 = vadd.f32 %v40, %v44
    %v47 = vadd.f32 %v41, %v45
    %v48 = vadd.f32 %v42, %v44
    %v49 = vadd.f32 %v43, %v45
    %50 = vst [vmem:[#allocation7] sm:$0xff] %v46
    %51 = vst [vmem:[#allocation7 + $0x8] sm:$0xff] %v47
    %52 = vst [vmem:[#allocation7 + $0x10] sm:$0xff] %v48
    %53 = vst [vmem:[#allocation7 + $0x18] sm:$0xff] %v49
    // Predicated region
    $region18: #{tpu_custom_call.1} parent=1 // pred_check
      _
    $region19: #{tpu_custom_call.1} parent=1 // pred_check_branch
      %55 = sbr.rel (0) target = $region21
    $region20: #{tpu_custom_call.1} parent=1 // pred_region
      %s57 = ssub.s32 512, 512
      %58 = vsyncadd [#allocation4], %s57
      %s59 = sshll.u32 [#allocation7], 4
      %s60 = int_to_ptr.vmem [resolvable:$true] %s59
      %65 = dma.vmem_to_hbm [thread:$0]  %s60, 512, %s2, [#allocation4], 128, 128, 8
    $region21: #{tpu_custom_call.1} parent=1 // pred_fallthru
      _
    // Predicated region
    $region22: #{tpu_custom_call.1} parent=1 // pred_check
      _
    $region23: #{tpu_custom_call.1} parent=1 // pred_check_branch
      %67 = sbr.rel (0) target = $region25
    $region24: #{tpu_custom_call.1} parent=1 // pred_region
      %68 = dma.done [#allocation4], 512
    $region25: #{tpu_custom_call.1} parent=1 // pred_fallthru
      _
    %69 = vsyncpa [#allocation3], 1
    %70 = vsyncpa [#allocation6], 1
    %71 = vsyncpa [#allocation4], 1

</llo_original>
